<compile_context>
chip_gen: v5e
topology: v5e:2x2
jax: 0.10.0
libtpu: 0.0.40
codegen_flags: <defaults>
</compile_context>

<pallas_src>
import functools
import math

import jax
import jax.numpy as jnp
from jax.experimental import pallas as pl
from jax.experimental.pallas import tpu as pltpu


def _round_up(x, m):
    return ((x + m - 1) // m) * m


def _aam_loss_kernel(pred_ref, tgt_ref, loss_ref,
                     sumsq, tgt_raw, inv_norm, phi_s, m_i, l_i,
                     *, cos_m, sin_m, scale, num_classes, block_c, c_padded):
    p = pl.program_id(1)          # 0: norm-accumulation pass, 1: logsumexp pass
    k = pl.program_id(2)          # class-block index
    n_k = pl.num_programs(2)

    x = pred_ref[...].astype(jnp.float32)                       # (bn, bc)
    tgt = tgt_ref[...]                                           # (bn, 1) int32
    col = jax.lax.broadcasted_iota(jnp.int32, x.shape, 1) + k * block_c
    is_tgt = col == tgt                                          # (bn, bc)

    # ---------------- phase 0: row sum(x^2) and raw target entry -----------
    @pl.when(p == 0)
    def _():
        @pl.when(k == 0)
        def _():
            sumsq[...] = jnp.zeros_like(sumsq)
            tgt_raw[...] = jnp.zeros_like(tgt_raw)
        # padded columns are zero-filled by the wrapper -> contribute nothing
        sumsq[...] += jnp.sum(x * x, axis=1, keepdims=True)
        tgt_raw[...] += jnp.sum(jnp.where(is_tgt, x, 0.0), axis=1, keepdims=True)

    # ---------------- phase 1: online logsumexp over scaled logits ---------
    @pl.when(p == 1)
    def _():
        @pl.when(k == 0)
        def _():
            # 1 / max(||x||, 1e-12)  == F.normalize(p=2, eps=1e-12) semantics
            inv = jax.lax.rsqrt(jnp.maximum(sumsq[...], 1e-24))
            cos_t = jnp.clip(tgt_raw[...] * inv, -1.0, 1.0)
            sin_t = jnp.sqrt(jnp.maximum(1.0 - cos_t * cos_t, 0.0))
            inv_norm[...] = inv
            phi_s[...] = (cos_t * cos_m - sin_t * sin_m) * scale
            m_i[...] = jnp.full_like(m_i, -jnp.inf)
            l_i[...] = jnp.zeros_like(l_i)

        logits = x * (inv_norm[...] * scale)                     # scale * cosine
        logits = jnp.where(is_tgt, phi_s[...], logits)           # target -> phi
        if c_padded:
            logits = jnp.where(col < num_classes, logits, -1e30)

        m_new = jnp.maximum(m_i[...], jnp.max(logits, axis=1, keepdims=True))
        l_i[...] = (l_i[...] * jnp.exp(m_i[...] - m_new)
                    + jnp.sum(jnp.exp(logits - m_new), axis=1, keepdims=True))
        m_i[...] = m_new

        @pl.when(k == n_k - 1)
        def _():
            # per-example cross entropy: logsumexp - target_logit
            loss_ref[...] = m_i[...] + jnp.log(l_i[...]) - phi_s[...]


def additive_angular_margin_loss(pred, target, margin=0.35, scale=64.0,
                                 reduction="mean", block_n=256, block_c=2048):
    """pred: (N, C) float (f32 or bf16), target: (N,) int. ArcFace-style CE."""
    N, C = pred.shape

    bn = min(_round_up(N, 8), _round_up(block_n, 8))
    n_pad = _round_up(N, bn)
    bc = min(_round_up(C, 128), _round_up(block_c, 128))
    c_pad = _round_up(C, bc)

    if (n_pad, c_pad) != (N, C):
        pred = jnp.pad(pred, ((0, n_pad - N), (0, c_pad - C)))
    tgt = target.astype(jnp.int32)
    if n_pad != N:
        tgt = jnp.pad(tgt, (0, n_pad - N))
    tgt = tgt.reshape(n_pad, 1)

    grid = (n_pad // bn, 2, c_pad // bc)

    kernel = functools.partial(
        _aam_loss_kernel,
        cos_m=math.cos(margin),
        sin_m=math.sin(margin),
        scale=scale,
        num_classes=C,
        block_c=bc,
        c_padded=(c_pad != C),
    )

    per_example = pl.pallas_call(
        kernel,
        out_shape=jax.ShapeDtypeStruct((n_pad, 1), jnp.float32),
        grid_spec=pltpu.PrefetchScalarGridSpec(
            num_scalar_prefetch=0,
            grid=grid,
            in_specs=[
                pl.BlockSpec((bn, bc), lambda i, p, k: (i, k)),   # pred tile
                pl.BlockSpec((bn, 1), lambda i, p, k: (i, 0)),    # target column
            ],
            out_specs=pl.BlockSpec((bn, 1), lambda i, p, k: (i, 0)),
            scratch_shapes=[pltpu.VMEM((bn, 1), jnp.float32)] * 6,
        ),
        compiler_params=pltpu.CompilerParams(
            dimension_semantics=("parallel", "arbitrary", "arbitrary")),
    )(pred, tgt)

    per_example = per_example[:N, 0]
    if reduction == "mean":
        return jnp.mean(per_example)
    if reduction == "sum":
        return jnp.sum(per_example)
    return per_example


def _reference_loss(pred, target, margin=0.35, scale=64.0):
    # Pure-JAX reference mirroring the PyTorch forward (with clamped sqrt arg).
    norm = jnp.sqrt(jnp.sum(pred * pred, axis=1, keepdims=True))
    cosine = pred / jnp.maximum(norm, 1e-12)
    sine = jnp.sqrt(jnp.maximum(1.0 - cosine * cosine, 0.0))
    phi = cosine * jnp.cos(margin) - sine * jnp.sin(margin)
    one_hot = jax.nn.one_hot(target, pred.shape[1], dtype=pred.dtype)
    logits = (one_hot * phi + (1.0 - one_hot) * cosine) * scale
    logp = jax.nn.log_softmax(logits, axis=1)
    nll = -jnp.take_along_axis(logp, target[:, None], axis=1)[:, 0]
    return jnp.mean(nll)


if __name__ == "__main__":
    key = jax.random.PRNGKey(0)
    k1, k2, k3, k4 = jax.random.split(key, 4)

    # Case 1: tiny demo shape (batch=8, classes=32) -> single (padded) C block.
    pred = jax.random.normal(k1, (8, 32), dtype=jnp.float32)
    target = jax.random.randint(k2, (8,), 0, 32, dtype=jnp.int32)
    loss = jax.block_until_ready(additive_angular_margin_loss(pred, target))
    ref = _reference_loss(pred, target)
    assert jnp.allclose(loss, ref, rtol=1e-5, atol=1e-5), (loss, ref)

    # Case 2: non-aligned shape exercising row/col padding and the multi-block
    # online logsumexp path (C=300 tiled with bc=128 -> 3 class blocks).
    pred2 = jax.random.normal(k3, (20, 300), dtype=jnp.float32)
    target2 = jax.random.randint(k4, (20,), 0, 300, dtype=jnp.int32)
    loss2 = jax.block_until_ready(
        additive_angular_margin_loss(pred2, target2, block_c=128))
    ref2 = _reference_loss(pred2, target2)
    assert jnp.allclose(loss2, ref2, rtol=1e-5, atol=1e-5), (loss2, ref2)

    print("KERNEL_OK")
</pallas_src>

<mosaic_0001>
module attributes {stable_mosaic.version = 11 : i64} {
  func.func @_aam_loss_kernel(%arg0: i32, %arg1: i32, %arg2: i32, %arg3: memref<8x128xf32, #tpu.memory_space<vmem>>, %arg4: memref<8x1xi32, #tpu.memory_space<vmem>>, %arg5: memref<8x1xf32, #tpu.memory_space<vmem>>, %arg6: memref<8x1xf32, #tpu.memory_space<vmem>>, %arg7: memref<8x1xf32, #tpu.memory_space<vmem>>, %arg8: memref<8x1xf32, #tpu.memory_space<vmem>>, %arg9: memref<8x1xf32, #tpu.memory_space<vmem>>, %arg10: memref<8x1xf32, #tpu.memory_space<vmem>>, %arg11: memref<8x1xf32, #tpu.memory_space<vmem>>) attributes {dimension_semantics = [#tpu.dimension_semantics<parallel>, #tpu.dimension_semantics<arbitrary>, #tpu.dimension_semantics<arbitrary>], iteration_bounds = array<i64: 1, 2, 1>, scalar_prefetch = 0 : i64, scratch_operands = 6 : i64, tpu.core_type = #tpu.core_type<tc>, window_params = [{transform_indices = @transform_0, window_bounds = array<i64: 8, 128>}, {transform_indices = @transform_1, window_bounds = array<i64: 8, 1>}, {transform_indices = @transform_2, window_bounds = array<i64: 8, 1>}]} {
    %c0 = arith.constant 0 : index
    %c0_0 = arith.constant 0 : index
    %0 = vector.load %arg3[%c0, %c0_0] : memref<8x128xf32, #tpu.memory_space<vmem>>, vector<8x128xf32>
    %c0_1 = arith.constant 0 : index
    %c0_2 = arith.constant 0 : index
    %1 = vector.load %arg4[%c0_1, %c0_2] : memref<8x1xi32, #tpu.memory_space<vmem>>, vector<8x1xi32>
    %2 = tpu.iota {dimensions = array<i32: 1>} : vector<8x128xi32>
    %c128_i32 = arith.constant 128 : i32
    %3 = arith.muli %arg2, %c128_i32 : i32
    %4 = vector.broadcast %3 : i32 to vector<8x128xi32>
    %5 = arith.addi %2, %4 : vector<8x128xi32>
    %6 = vector.broadcast %1 : vector<8x1xi32> to vector<8x128xi32>
    %7 = arith.cmpi eq, %5, %6 : vector<8x128xi32>
    %c0_i32 = arith.constant 0 : i32
    %8 = arith.cmpi eq, %arg1, %c0_i32 : i32
    %9 = arith.extui %8 : i1 to i32
    %c0_i32_3 = arith.constant 0 : i32
    %10 = arith.cmpi ne, %9, %c0_i32_3 : i32
    scf.if %10 {
      %c0_i32_5 = arith.constant 0 : i32
      %14 = arith.cmpi eq, %arg2, %c0_i32_5 : i32
      %15 = arith.extui %14 : i1 to i32
      %c0_i32_6 = arith.constant 0 : i32
      %16 = arith.cmpi ne, %15, %c0_i32_6 : i32
      scf.if %16 {
        %cst_17 = arith.constant 0.000000e+00 : f32
        %30 = vector.broadcast %cst_17 : f32 to vector<8x1xf32>
        %c0_18 = arith.constant 0 : index
        %c0_19 = arith.constant 0 : index
        %31 = vector.load %arg6[%c0_18, %c0_19] : memref<8x1xf32, #tpu.memory_space<vmem>>, vector<8x1xf32>
        tpu.vector_store %arg6[%c0_18, %c0_19], %30 {strides = array<i32>} : memref<8x1xf32, #tpu.memory_space<vmem>>, vector<8x1xf32>,
        %cst_20 = arith.constant 0.000000e+00 : f32
        %32 = vector.broadcast %cst_20 : f32 to vector<8x1xf32>
        %c0_21 = arith.constant 0 : index
        %c0_22 = arith.constant 0 : index
        %33 = vector.load %arg7[%c0_21, %c0_22] : memref<8x1xf32, #tpu.memory_space<vmem>>, vector<8x1xf32>
        tpu.vector_store %arg7[%c0_21, %c0_22], %32 {strides = array<i32>} : memref<8x1xf32, #tpu.memory_space<vmem>>, vector<8x1xf32>,
      } else {
      }
      %c0_7 = arith.constant 0 : index
      %c0_8 = arith.constant 0 : index
      %17 = vector.load %arg6[%c0_7, %c0_8] : memref<8x1xf32, #tpu.memory_space<vmem>>, vector<8x1xf32>
      %18 = arith.mulf %0, %0 : vector<8x128xf32>
      %cst = arith.constant dense<0.000000e+00> : vector<8xf32>
      %19 = vector.multi_reduction <add>, %18, %cst [1] : vector<8x128xf32> to vector<8xf32>
      %20 = vector.shape_cast %19 : vector<8xf32> to vector<8x1xf32>
      %21 = arith.addf %17, %20 : vector<8x1xf32>
      %c0_9 = arith.constant 0 : index
      %c0_10 = arith.constant 0 : index
      %22 = vector.load %arg6[%c0_9, %c0_10] : memref<8x1xf32, #tpu.memory_space<vmem>>, vector<8x1xf32>
      tpu.vector_store %arg6[%c0_9, %c0_10], %21 {strides = array<i32>} : memref<8x1xf32, #tpu.memory_space<vmem>>, vector<8x1xf32>,
      %c0_11 = arith.constant 0 : index
      %c0_12 = arith.constant 0 : index
      %23 = vector.load %arg7[%c0_11, %c0_12] : memref<8x1xf32, #tpu.memory_space<vmem>>, vector<8x1xf32>
      %cst_13 = arith.constant 0.000000e+00 : f32
      %24 = vector.broadcast %cst_13 : f32 to vector<8x128xf32>
      %25 = arith.select %7, %0, %24 : vector<8x128xi1>, vector<8x128xf32>
      %cst_14 = arith.constant dense<0.000000e+00> : vector<8xf32>
      %26 = vector.multi_reduction <add>, %25, %cst_14 [1] : vector<8x128xf32> to vector<8xf32>
      %27 = vector.shape_cast %26 : vector<8xf32> to vector<8x1xf32>
      %28 = arith.addf %23, %27 : vector<8x1xf32>
      %c0_15 = arith.constant 0 : index
      %c0_16 = arith.constant 0 : index
      %29 = vector.load %arg7[%c0_15, %c0_16] : memref<8x1xf32, #tpu.memory_space<vmem>>, vector<8x1xf32>
      tpu.vector_store %arg7[%c0_15, %c0_16], %28 {strides = array<i32>} : memref<8x1xf32, #tpu.memory_space<vmem>>, vector<8x1xf32>,
    } else {
    }
    %c1_i32 = arith.constant 1 : i32
    %11 = arith.cmpi eq, %arg1, %c1_i32 : i32
    %12 = arith.extui %11 : i1 to i32
    %c0_i32_4 = arith.constant 0 : i32
    %13 = arith.cmpi ne, %12, %c0_i32_4 : i32
    scf.if %13 {
      %c0_i32_5 = arith.constant 0 : i32
      %14 = arith.cmpi eq, %arg2, %c0_i32_5 : i32
      %15 = arith.extui %14 : i1 to i32
      %c0_i32_6 = arith.constant 0 : i32
      %16 = arith.cmpi ne, %15, %c0_i32_6 : i32
      scf.if %16 {
        %c0_26 = arith.constant 0 : index
        %c0_27 = arith.constant 0 : index
        %50 = vector.load %arg6[%c0_26, %c0_27] : memref<8x1xf32, #tpu.memory_space<vmem>>, vector<8x1xf32>
        %cst_28 = arith.constant 1.000000e-24 : f32
        %51 = vector.broadcast %cst_28 : f32 to vector<8x1xf32>
        %52 = arith.maximumf %50, %51 : vector<8x1xf32>
        %53 = math.rsqrt %52 : vector<8x1xf32>
        %c0_29 = arith.constant 0 : index
        %c0_30 = arith.constant 0 : index
        %54 = vector.load %arg7[%c0_29, %c0_30] : memref<8x1xf32, #tpu.memory_space<vmem>>, vector<8x1xf32>
        %55 = arith.mulf %54, %53 : vector<8x1xf32>
        %cst_31 = arith.constant -1.000000e+00 : f32
        %cst_32 = arith.constant 1.000000e+00 : f32
        %56 = vector.broadcast %cst_31 : f32 to vector<8x1xf32>
        %57 = arith.maximumf %56, %55 : vector<8x1xf32>
        %58 = vector.broadcast %cst_32 : f32 to vector<8x1xf32>
        %59 = arith.minimumf %58, %57 : vector<8x1xf32>
        %60 = arith.mulf %59, %59 : vector<8x1xf32>
        %cst_33 = arith.constant 1.000000e+00 : f32
        %61 = vector.broadcast %cst_33 : f32 to vector<8x1xf32>
        %62 = arith.subf %61, %60 : vector<8x1xf32>
        %cst_34 = arith.constant 0.000000e+00 : f32
        %63 = vector.broadcast %cst_34 : f32 to vector<8x1xf32>
        %64 = arith.maximumf %62, %63 : vector<8x1xf32>
        %65 = math.sqrt %64 : vector<8x1xf32>
        %c0_35 = arith.constant 0 : index
        %c0_36 = arith.constant 0 : index
        %66 = vector.load %arg8[%c0_35, %c0_36] : memref<8x1xf32, #tpu.memory_space<vmem>>, vector<8x1xf32>
        tpu.vector_store %arg8[%c0_35, %c0_36], %53 {strides = array<i32>} : memref<8x1xf32, #tpu.memory_space<vmem>>, vector<8x1xf32>,
        %cst_37 = arith.constant 0.939372718 : f32
        %67 = vector.broadcast %cst_37 : f32 to vector<8x1xf32>
        %68 = arith.mulf %59, %67 : vector<8x1xf32>
        %cst_38 = arith.constant 0.342897803 : f32
        %69 = vector.broadcast %cst_38 : f32 to vector<8x1xf32>
        %70 = arith.mulf %65, %69 : vector<8x1xf32>
        %71 = arith.subf %68, %70 : vector<8x1xf32>
        %cst_39 = arith.constant 6.400000e+01 : f32
        %72 = vector.broadcast %cst_39 : f32 to vector<8x1xf32>
        %73 = arith.mulf %71, %72 : vector<8x1xf32>
        %c0_40 = arith.constant 0 : index
        %c0_41 = arith.constant 0 : index
        %74 = vector.load %arg9[%c0_40, %c0_41] : memref<8x1xf32, #tpu.memory_space<vmem>>, vector<8x1xf32>
        tpu.vector_store %arg9[%c0_40, %c0_41], %73 {strides = array<i32>} : memref<8x1xf32, #tpu.memory_space<vmem>>, vector<8x1xf32>,
        %cst_42 = arith.constant 0xFF800000 : f32
        %75 = vector.broadcast %cst_42 : f32 to vector<8x1xf32>
        %c0_43 = arith.constant 0 : index
        %c0_44 = arith.constant 0 : index
        %76 = vector.load %arg10[%c0_43, %c0_44] : memref<8x1xf32, #tpu.memory_space<vmem>>, vector<8x1xf32>
        tpu.vector_store %arg10[%c0_43, %c0_44], %75 {strides = array<i32>} : memref<8x1xf32, #tpu.memory_space<vmem>>, vector<8x1xf32>,
        %cst_45 = arith.constant 0.000000e+00 : f32
        %77 = vector.broadcast %cst_45 : f32 to vector<8x1xf32>
        %c0_46 = arith.constant 0 : index
        %c0_47 = arith.constant 0 : index
        %78 = vector.load %arg11[%c0_46, %c0_47] : memref<8x1xf32, #tpu.memory_space<vmem>>, vector<8x1xf32>
        tpu.vector_store %arg11[%c0_46, %c0_47], %77 {strides = array<i32>} : memref<8x1xf32, #tpu.memory_space<vmem>>, vector<8x1xf32>,
      } else {
      }
      %c0_7 = arith.constant 0 : index
      %c0_8 = arith.constant 0 : index
      %17 = vector.load %arg8[%c0_7, %c0_8] : memref<8x1xf32, #tpu.memory_space<vmem>>, vector<8x1xf32>
      %cst = arith.constant 6.400000e+01 : f32
      %18 = vector.broadcast %cst : f32 to vector<8x1xf32>
      %19 = arith.mulf %17, %18 : vector<8x1xf32>
      %20 = vector.broadcast %19 : vector<8x1xf32> to vector<8x128xf32>
      %21 = arith.mulf %0, %20 : vector<8x128xf32>
      %c0_9 = arith.constant 0 : index
      %c0_10 = arith.constant 0 : index
      %22 = vector.load %arg9[%c0_9, %c0_10] : memref<8x1xf32, #tpu.memory_space<vmem>>, vector<8x1xf32>
      %23 = vector.shape_cast %22 : vector<8x1xf32> to vector<8x1xf32>
      %24 = vector.broadcast %23 : vector<8x1xf32> to vector<8x128xf32>
      %25 = arith.select %7, %24, %21 : vector<8x128xi1>, vector<8x128xf32>
      %c32_i32 = arith.constant 32 : i32
      %26 = vector.broadcast %c32_i32 : i32 to vector<8x128xi32>
      %27 = arith.cmpi slt, %5, %26 : vector<8x128xi32>
      %cst_11 = arith.constant -1.000000e+30 : f32
      %28 = vector.broadcast %cst_11 : f32 to vector<8x128xf32>
      %29 = arith.select %27, %25, %28 : vector<8x128xi1>, vector<8x128xf32>
      %c0_12 = arith.constant 0 : index
      %c0_13 = arith.constant 0 : index
      %30 = vector.load %arg10[%c0_12, %c0_13] : memref<8x1xf32, #tpu.memory_space<vmem>>, vector<8x1xf32>
      %cst_14 = arith.constant dense<0xFF800000> : vector<8xf32>
      %31 = vector.multi_reduction <maximumf>, %29, %cst_14 [1] : vector<8x128xf32> to vector<8xf32>
      %32 = vector.shape_cast %31 : vector<8xf32> to vector<8x1xf32>
      %33 = arith.maximumf %30, %32 : vector<8x1xf32>
      %c0_15 = arith.constant 0 : index
      %c0_16 = arith.constant 0 : index
      %34 = vector.load %arg11[%c0_15, %c0_16] : memref<8x1xf32, #tpu.memory_space<vmem>>, vector<8x1xf32>
      %c0_17 = arith.constant 0 : index
      %c0_18 = arith.constant 0 : index
      %35 = vector.load %arg10[%c0_17, %c0_18] : memref<8x1xf32, #tpu.memory_space<vmem>>, vector<8x1xf32>
      %36 = arith.subf %35, %33 : vector<8x1xf32>
      %37 = math.exp %36 : vector<8x1xf32>
      %38 = arith.mulf %34, %37 : vector<8x1xf32>
      %39 = vector.broadcast %33 : vector<8x1xf32> to vector<8x128xf32>
      %40 = arith.subf %29, %39 : vector<8x128xf32>
      %41 = math.exp %40 : vector<8x128xf32>
      %cst_19 = arith.constant dense<0.000000e+00> : vector<8xf32>
      %42 = vector.multi_reduction <add>, %41, %cst_19 [1] : vector<8x128xf32> to vector<8xf32>
      %43 = vector.shape_cast %42 : vector<8xf32> to vector<8x1xf32>
      %44 = arith.addf %38, %43 : vector<8x1xf32>
      %c0_20 = arith.constant 0 : index
      %c0_21 = arith.constant 0 : index
      %45 = vector.load %arg11[%c0_20, %c0_21] : memref<8x1xf32, #tpu.memory_space<vmem>>, vector<8x1xf32>
      tpu.vector_store %arg11[%c0_20, %c0_21], %44 {strides = array<i32>} : memref<8x1xf32, #tpu.memory_space<vmem>>, vector<8x1xf32>,
      %c0_22 = arith.constant 0 : index
      %c0_23 = arith.constant 0 : index
      %46 = vector.load %arg10[%c0_22, %c0_23] : memref<8x1xf32, #tpu.memory_space<vmem>>, vector<8x1xf32>
      tpu.vector_store %arg10[%c0_22, %c0_23], %33 {strides = array<i32>} : memref<8x1xf32, #tpu.memory_space<vmem>>, vector<8x1xf32>,
      %c0_i32_24 = arith.constant 0 : i32
      %47 = arith.cmpi eq, %arg2, %c0_i32_24 : i32
      %48 = arith.extui %47 : i1 to i32
      %c0_i32_25 = arith.constant 0 : i32
      %49 = arith.cmpi ne, %48, %c0_i32_25 : i32
      scf.if %49 {
        %c0_26 = arith.constant 0 : index
        %c0_27 = arith.constant 0 : index
        %50 = vector.load %arg10[%c0_26, %c0_27] : memref<8x1xf32, #tpu.memory_space<vmem>>, vector<8x1xf32>
        %c0_28 = arith.constant 0 : index
        %c0_29 = arith.constant 0 : index
        %51 = vector.load %arg11[%c0_28, %c0_29] : memref<8x1xf32, #tpu.memory_space<vmem>>, vector<8x1xf32>
        %52 = math.log %51 : vector<8x1xf32>
        %53 = arith.addf %50, %52 : vector<8x1xf32>
        %c0_30 = arith.constant 0 : index
        %c0_31 = arith.constant 0 : index
        %54 = vector.load %arg9[%c0_30, %c0_31] : memref<8x1xf32, #tpu.memory_space<vmem>>, vector<8x1xf32>
        %55 = arith.subf %53, %54 : vector<8x1xf32>
        %c0_32 = arith.constant 0 : index
        %c0_33 = arith.constant 0 : index
        %56 = vector.load %arg5[%c0_32, %c0_33] : memref<8x1xf32, #tpu.memory_space<vmem>>, vector<8x1xf32>
        tpu.vector_store %arg5[%c0_32, %c0_33], %55 {strides = array<i32>} : memref<8x1xf32, #tpu.memory_space<vmem>>, vector<8x1xf32>,
      } else {
      }
    } else {
    }
    return
  }
  func.func @transform_0(%arg0: i32, %arg1: i32, %arg2: i32) -> (i32, i32) {
    %c0_i32 = arith.constant 0 : i32
    return %arg0, %arg2 : i32, i32
  }
  func.func @transform_1(%arg0: i32, %arg1: i32, %arg2: i32) -> (i32, i32) {
    %c0_i32 = arith.constant 0 : i32
    %c0_i32_0 = arith.constant 0 : i32
    return %arg0, %c0_i32 : i32, i32
  }
  func.func @transform_2(%arg0: i32, %arg1: i32, %arg2: i32) -> (i32, i32) {
    %c0_i32 = arith.constant 0 : i32
    %c0_i32_0 = arith.constant 0 : i32
    return %arg0, %c0_i32 : i32, i32
  }
}

</mosaic_0001>

<llo_original>
// kernel: tpu_custom_call.1
$region0: #{tpu_custom_call.1}
  #allocation0 [shape = 'u32[]', space=smem, size = 0x4, offset = 0x4, fixed_abs, tag = 'smem constant byte address 0x4 - core index']
  #allocation1 [shape = 'u32[72,128]{1,0:T(1,128)}', space=vmem, size = 0x9000, scoped, tag = 'internal scratch']
  #allocation2 [shape = 'f32[8,1]{1,0:T(8,128)}', space=vmem, size = 0x1000, scoped, tag = 'scratch operand']
  #allocation3 [shape = 'f32[8,1]{1,0:T(8,128)}', space=vmem, size = 0x1000, scoped, tag = 'scratch operand']
  #allocation4 [shape = 'f32[8,1]{1,0:T(8,128)}', space=vmem, size = 0x1000, scoped, tag = 'scratch operand']
  #allocation5 [shape = 'f32[8,1]{1,0:T(8,128)}', space=vmem, size = 0x1000, scoped, tag = 'scratch operand']
  #allocation6 [shape = 'f32[8,1]{1,0:T(8,128)}', space=vmem, size = 0x1000, scoped, tag = 'scratch operand']
  #allocation7 [shape = 'f32[8,1]{1,0:T(8,128)}', space=vmem, size = 0x1000, scoped, tag = 'scratch operand']
  %s0 = inlined_call_operand.vmem [shape: f32[8,128], index: 0, kind: input, shape index: {}]
  %s1 = inlined_call_operand.vmem [shape: s32[8,1], index: 1, kind: input, shape index: {}]
  %s2 = inlined_call_operand.vmem [shape: f32[8,1], index: 2, kind: output, shape index: {}]
  %s3 = sld [smem:[#allocation0]]
  $region61: #{tpu_custom_call.1} parent=0
    _
  %s5 = ssub.s32 1, %s3
  %s6 = scalar_select 0, %s5, %s3
  loop: start=0, step=1, limit=4
  $region2: #{tpu_custom_call.1} parent=0 // loop_pre_header
    _
  $region3: #{tpu_custom_call.1} parent=0 // loop_header
    %s8 = sphi 0, %s12
    %p9 = scmp.ge.s32.totalorder %s8, 4
    %s15 = sphi 0, %s34
    %s16 = sphi 0, %s30
    %s17 = sphi 0, %s26
    %s18 = sphi 0, %s15
    %s19 = sphi 0, %s16
    %s20 = sphi 0, %s17
    %s21 = sphi 0, %s18
    %s22 = sphi 0, %s19
    %s23 = sphi 0, %s20
    %s39 = sphi 0, %s41
    %s42 = sphi 0, %s39
    %s43 = sphi 0, %s42
    %s59 = sphi 0, %s43
    %s65 = sphi 0, %s67
    %s68 = sphi 0, %s65
    %s69 = sphi 0, %s68
    %s85 = sphi 0, %s69
    %s91 = sphi 0, %s93
    %s94 = sphi 0, %s91
    %s95 = sphi 0, %s94
    %s111 = sphi 0, %s95
  $region4: #{tpu_custom_call.1} parent=0 // loop_header_branch
    %11 = sbr.rel (%p9) target = $region8
  $region5: #{tpu_custom_call.1} parent=0 // loop_body
    %s13 = ssub.s32 %s8, 1
    %s14 = ssub.s32 %s8, 2
    %s24 = sadd.s32 1, %s17
    %p25 = scmp.ge.s32.totalorder %s24, 1
    %s26 = scalar_select %p25, 0, %s24
    %s27 = sadd.s32 1, %s16
    %s28 = scalar_select %p25, %s27, %s16
    %p29 = scmp.ge.s32.totalorder %s28, 2
    %s30 = scalar_select %p29, 0, %s28
    %s31 = sadd.s32 1, %s15
    %s32 = scalar_select %p29, %s31, %s15
    %p33 = scmp.ge.s32.totalorder %s32, 1
    %s34 = scalar_select %p33, 0, %s32
    %s35 = ssub.s32 %s15, %s34
    %s36 = ssub.s32 %s17, %s26
    %s37 = sor.u32 %s35, %s36
    %p38 = scmp.eq.s32.totalorder %s37, 0
    %s40 = sadd.s32 %s39, 1
    %s41 = scalar_select %p38, %s39, %s40
    %p44 = pneg %p38
    %p45 = scmp.eq.s32.totalorder %s8, 1
    %p46 = por %p44, %p45
    %p47 = scmp.ne.s32.totalorder %s39, %s42
    %p48 = scmp.eq.s32.totalorder %s8, 0
    %p49 = por %p47, %p48
    %p50 = scmp.ne.s32.totalorder %s39, %s42
    %p51 = scmp.eq.s32.totalorder %s13, 1
    %p52 = por %p50, %p51
    %p53 = scmp.ne.s32.totalorder %s42, %s43
    %p54 = scmp.eq.s32.totalorder %s13, 0
    %p55 = por %p53, %p54
    %p56 = scmp.ne.s32.totalorder %s42, %s43
    %p57 = scmp.eq.s32.totalorder %s14, 1
    %p58 = por %p56, %p57
    %p60 = scmp.ne.s32.totalorder %s43, %s59
    %p61 = scmp.eq.s32.totalorder %s14, 0
    %p62 = por %p60, %p61
    %s63 = ssub.s32 %s15, %s34
    %p64 = scmp.eq.s32.totalorder %s63, 0
    %s66 = sadd.s32 %s65, 1
    %s67 = scalar_select %p64, %s65, %s66
    %p70 = pneg %p64
    %p71 = scmp.eq.s32.totalorder %s8, 1
    %p72 = por %p70, %p71
    %p73 = scmp.ne.s32.totalorder %s65, %s68
    %p74 = scmp.eq.s32.totalorder %s8, 0
    %p75 = por %p73, %p74
    %p76 = scmp.ne.s32.totalorder %s65, %s68
    %p77 = scmp.eq.s32.totalorder %s13, 1
    %p78 = por %p76, %p77
    %p79 = scmp.ne.s32.totalorder %s68, %s69
    %p80 = scmp.eq.s32.totalorder %s13, 0
    %p81 = por %p79, %p80
    %p82 = scmp.ne.s32.totalorder %s68, %s69
    %p83 = scmp.eq.s32.totalorder %s14, 1
    %p84 = por %p82, %p83
    %p86 = scmp.ne.s32.totalorder %s69, %s85
    %p87 = scmp.eq.s32.totalorder %s14, 0
    %p88 = por %p86, %p87
    %s89 = ssub.s32 %s15, %s34
    %p90 = scmp.eq.s32.totalorder %s89, 0
    %s92 = sadd.s32 %s91, 1
    %s93 = scalar_select %p90, %s91, %s92
    %p96 = pneg %p90
    %p97 = scmp.eq.s32.totalorder %s8, 1
    %p98 = por %p96, %p97
    %p99 = scmp.ne.s32.totalorder %s91, %s94
    %p100 = scmp.eq.s32.totalorder %s8, 0
    %p101 = por %p99, %p100
    %p102 = scmp.ne.s32.totalorder %s91, %s94
    %p103 = scmp.eq.s32.totalorder %s13, 1
    %p104 = por %p102, %p103
    %p105 = scmp.ne.s32.totalorder %s94, %s95
    %p106 = scmp.eq.s32.totalorder %s13, 0
    %p107 = por %p105, %p106
    %p108 = scmp.ne.s32.totalorder %s94, %s95
    %p109 = scmp.eq.s32.totalorder %s14, 1
    %p110 = por %p108, %p109
    %p112 = scmp.ne.s32.totalorder %s95, %s111
    %p113 = scmp.eq.s32.totalorder %s14, 0
    %p114 = por %p112, %p113
    %p115 = scmp.le.s32.totalorder 1, %s8
    %p116 = scmp.lt.s32.totalorder %s8, 3
    %p117 = pnand %p115, %p116
    %p118 = pneg %p117
    // Predicated region
    $region9: #{tpu_custom_call.1} parent=5 // pred_check
      _
    $region10: #{tpu_custom_call.1} parent=5 // pred_check_branch
      %120 = sbr.rel (%p117) target = $region12
    $region11: #{tpu_custom_call.1} parent=5 // pred_region
      %s121 = ssub.s32 %s8, 1
      // Predicated region
      $region13: #{tpu_custom_call.1} parent=11 // pred_check
        %p122 = pneg %p55
      $region14: #{tpu_custom_call.1} parent=11 // pred_check_branch
        %124 = sbr.rel (%p122) target = $region16
      $region15: #{tpu_custom_call.1} parent=11 // pred_region
        %p125 = scmp.lt.s32.totalorder %s18, 0
        %s126 = scalar_select %p125, %s18, 0
        %p127 = scmp.lt.s32.totalorder %s20, 0
        %s128 = scalar_select %p127, %s20, 0
        %s129 = sadd.s32 %s128, %s126
        %s130 = smul.addr %s129, 8
        %s131 = scalar_lea.vmem %s0, %s130
      $region16: #{tpu_custom_call.1} parent=11 // pred_fallthru
        _
      // Predicated region
      $region17: #{tpu_custom_call.1} parent=11 // pred_check
        %p132 = pneg %p81
      $region18: #{tpu_custom_call.1} parent=11 // pred_check_branch
        %134 = sbr.rel (%p132) target = $region20
      $region19: #{tpu_custom_call.1} parent=11 // pred_region
        %p135 = scmp.lt.s32.totalorder %s18, 0
        %s136 = scalar_select %p135, %s18, 0
        %s137 = smul.addr %s136, 8
        %s138 = scalar_lea.vmem %s1, %s137
      $region20: #{tpu_custom_call.1} parent=11 // pred_fallthru
        _
    $region12: #{tpu_custom_call.1} parent=5 // pred_fallthru
      _
    %p139 = scmp.lt.s32.totalorder %s8, 2
    // Predicated region
    $region21: #{tpu_custom_call.1} parent=5 // pred_check
      %p140 = pneg %p139
    $region22: #{tpu_custom_call.1} parent=5 // pred_check_branch
      %142 = sbr.rel (%p140) target = $region24
    $region23: #{tpu_custom_call.1} parent=5 // pred_region
      _
    $region24: #{tpu_custom_call.1} parent=5 // pred_fallthru
      _
    %p143 = scmp.le.s32.totalorder 1, %s8
    %p144 = scmp.lt.s32.totalorder %s8, 3
    %p145 = pnand %p143, %p144
    %p146 = pneg %p145
    // Predicated region
    $region25: #{tpu_custom_call.1} parent=5 // pred_check
      _
    $region26: #{tpu_custom_call.1} parent=5 // pred_check_branch
      %148 = sbr.rel (%p145) target = $region28
    $region27: #{tpu_custom_call.1} parent=5 // pred_region
      %s149 = ssub.s32 %s8, 1
      %p150 = scmp.lt.s32.totalorder %s18, 0
      %s151 = scalar_select %p150, %s18, 0
      %p152 = scmp.lt.s32.totalorder %s20, 0
      %s153 = scalar_select %p152, %s20, 0
      %s154 = sadd.s32 %s153, %s151
      %s155 = smul.addr %s154, 8
      %s156 = scalar_lea.vmem %s0, %s155
      %p157 = pneg %p55
      %p158 = pneg %p52
      %p159 = scmp.lt.s32.totalorder %s18, 0
      %s160 = scalar_select %p159, %s18, 0
      %s161 = smul.addr %s160, 8
      %s162 = scalar_lea.vmem %s1, %s161
      %p163 = pneg %p81
      %p164 = pneg %p78
      %p165 = pneg %p107
      %p166 = pneg %p104
      %p167 = scmp.lt.s32.totalorder %s18, 0
      %s168 = scalar_select %p167, %s18, 0
      %s169 = smul.addr %s168, 8
      %s170 = scalar_lea.vmem %s2, %s169
      %p171 = scmp.lt.s32.totalorder %s18, 0
      %s172 = scalar_select %p171, %s18, 0
      %p173 = scmp.lt.s32.totalorder %s20, 0
      %s174 = scalar_select %p173, %s20, 0
      %s175 = sadd.s32 %s174, %s172
      %s176 = smul.addr %s175, 8
      %s177 = scalar_lea.vmem %s0, %s176
      %p178 = scmp.lt.s32.totalorder %s18, 0
      %s179 = scalar_select %p178, %s18, 0
      %s180 = smul.addr %s179, 8
      %s181 = scalar_lea.vmem %s1, %s180
      %p182 = scmp.lt.s32.totalorder %s18, 0
      %s183 = scalar_select %p182, %s18, 0
      %s184 = smul.addr %s183, 8
      %s185 = scalar_lea.vmem %s2, %s184
      %v186 = vld [vmem:[%s177] sm:$0xff]
      %v187 = vld [vmem:[%s181] sm:$0xff]
      %v188 = vlaneseq
      %v189 = vand.u32 %v188, 127
      %s190 = smul.u32 %s20, 128
      %v191 = vstv %s190
      %v192 = vadd.s32 %v189, %v191
      %193 = vset.pattern.permute.xlu0 0
      %194 = vperm.xlu0 %193, %v187
      %v195 = vpop.permute.xlu0 %194
      %vm196 = vcmp.eq.s32.totalorder %v192, %v195
      %p197 = scmp.eq.s32.totalorder %s19, 0
      // Predicated region
      $region29: #{tpu_custom_call.1} parent=27 // pred_check
        %p198 = pneg %p197
      $region30: #{tpu_custom_call.1} parent=27 // pred_check_branch
        %200 = sbr.rel (%p198) target = $region32
      $region31: #{tpu_custom_call.1} parent=27 // pred_region
        %p201 = scmp.eq.s32.totalorder %s20, 0
        // Predicated region
        $region33: #{tpu_custom_call.1} parent=31 // pred_check
          %p202 = pneg %p201
        $region34: #{tpu_custom_call.1} parent=31 // pred_check_branch
          %204 = sbr.rel (%p202) target = $region36
        $region35: #{tpu_custom_call.1} parent=31 // pred_region
          %vm205 = vcmask 7168
          %206 = vst.msk [vmem:[#allocation2] sm:$0xff] %vm205, 0.0
          %207 = vst.msk [vmem:[#allocation3] sm:$0xff] %vm205, 0.0
        $region36: #{tpu_custom_call.1} parent=31 // pred_fallthru
          _
        %v208 = vld [vmem:[#allocation2] sm:$0xff]
        %v209 = vmul.f32 %v186, %v186
        %210 = vadd.xlane.f32.xlu0 %v209
        %v211 = vpop.xlane.xlu0 %210
        %v212 = vadd.f32 %v208, %v211
        %vm213 = vcmask 7168
        %214 = vst.msk [vmem:[#allocation2] sm:$0xff] %vm213, %v212
        %v215 = vld [vmem:[#allocation3] sm:$0xff]
        %v216 = vsel %vm196, %v186, 0.0
        %217 = vadd.xlane.f32.xlu0 %v216
        %v218 = vpop.xlane.xlu0 %217
        %v219 = vadd.f32 %v215, %v218
        %220 = vst.msk [vmem:[#allocation3] sm:$0xff] %vm213, %v219
      $region32: #{tpu_custom_call.1} parent=27 // pred_fallthru
        _
      %p221 = scmp.eq.s32.totalorder %s19, 1
      // Predicated region
      $region37: #{tpu_custom_call.1} parent=27 // pred_check
        %p222 = pneg %p221
      $region38: #{tpu_custom_call.1} parent=27 // pred_check_branch
        %224 = sbr.rel (%p222) target = $region40
      $region39: #{tpu_custom_call.1} parent=27 // pred_region
        %p225 = scmp.eq.s32.totalorder %s20, 0
        // Predicated region
        $region41: #{tpu_custom_call.1} parent=39 // pred_check
          %p226 = pneg %p225
        $region42: #{tpu_custom_call.1} parent=39 // pred_check_branch
          %228 = sbr.rel (%p226) target = $region44
        $region43: #{tpu_custom_call.1} parent=39 // pred_region
          %v229 = vld [vmem:[#allocation2] sm:$0xff]
          %v230 = vmax.f32 %v229, 1e-24
          %v231 = vrsqrt.pop %v230
          %v232 = vmul.f32 %v231, %v230
          %v233 = vmul.f32 %v232, %v231
          %v234 = vmul.f32 0.5, %v233
          %v235 = vsub.f32 1.5, %v234
          %v236 = vmul.f32 %v231, %v235
          %vm237 = vweird.f32 %v230
          %vm238 = vweird.f32 %v231
          %vm239 = vmor %vm237, %vm238
          %v240 = vsel %vm239, %v231, %v236
          %v241 = vld [vmem:[#allocation3] sm:$0xff]
          %v242 = vmul.f32 %v241, %v240
          %v243 = vmax.f32 %v242, -1.0
          %v244 = vmin.f32 %v243, 1.0
          %v245 = vmul.f32 %v244, %v244
          %v246 = vsub.f32 1.0, %v245
          %v247 = vmax.f32 %v246, 0.0
          %v248 = vrsqrt.pop %v247
          %v249 = vmul.f32 %v248, %v247
          %v250 = vmul.f32 %v249, %v248
          %v251 = vmul.f32 0.5, %v250
          %v252 = vsub.f32 1.5, %v251
          %v253 = vmul.f32 %v248, %v252
          %v254 = vmul.f32 %v247, %v253
          %vm255 = vcmp.eq.f32.partialorder %v247, inf
          %v256 = vsel %vm255, %v247, %v254
          %vm257 = vcmp.eq.f32.partialorder %v247, 0.0
          %v258 = vand.u32 %v247, 2147483648
          %v259 = vsel %vm257, %v258, %v256
          %vm260 = vcmask 7168
          %261 = vst.msk [vmem:[#allocation4] sm:$0xff] %vm260, %v240
          %v262 = vmul.f32 %v244, 0.9393727
          %v263 = vmul.f32 %v259, 0.3428978
          %v264 = vsub.f32 %v262, %v263
          %v265 = vmul.f32 %v264, 64.0
          %266 = vst.msk [vmem:[#allocation5] sm:$0xff] %vm260, %v265
          %267 = vst.msk [vmem:[#allocation6] sm:$0xff] %vm260, -inf
          %268 = vst.msk [vmem:[#allocation7] sm:$0xff] %vm260, 0.0
        $region44: #{tpu_custom_call.1} parent=39 // pred_fallthru
          _
        %v269 = vld [vmem:[#allocation4] sm:$0xff]
        %v270 = vmul.f32 %v269, 64.0
        %272 = vset.pattern.permute.xlu0 0
        %273 = vperm.xlu0 %272, %v270
        %v274 = vpop.permute.xlu0 %273
        %v276 = vmul.f32 %v186, %v274
        %v277 = vld [vmem:[#allocation5] sm:$0xff]
        %279 = vset.pattern.permute.xlu0 0
        %280 = vperm.xlu0 %279, %v277
        %v281 = vpop.permute.xlu0 %280
        %v283 = vsel %vm196, %v281, %v276
        %vm284 = vcmp.lt.s32.totalorder %v192, 32
        %v285 = vsel %vm284, %v283, -1e+30
        %v286 = vld [vmem:[#allocation6] sm:$0xff]
        %287 = vmax.xlane.f32.xlu0 %v285
        %v288 = vpop.xlane.xlu0 %287
        %v289 = vmax.f32 %v286, %v288
        %v290 = vld [vmem:[#allocation7] sm:$0xff]
        %v291 = vsub.f32 %v286, %v289
        %v292 = vmul.f32 %v291, 1.442695
        %v293 = vpow.pop %v292
        %v294 = vmul.f32 %v290, %v293
        %296 = vset.pattern.permute.xlu0 0
        %297 = vperm.xlu0 %296, %v289
        %v298 = vpop.permute.xlu0 %297
        %v300 = vsub.f32 %v285, %v298
        %v301 = vmul.f32 %v300, 1.442695
        %v302 = vpow.pop %v301
        %303 = vadd.xlane.f32.xlu0 %v302
        %v304 = vpop.xlane.xlu0 %303
        %v305 = vadd.f32 %v294, %v304
        %vm306 = vcmask 7168
        %307 = vst.msk [vmem:[#allocation7] sm:$0xff] %vm306, %v305
        %308 = vst.msk [vmem:[#allocation6] sm:$0xff] %vm306, %v289
        // Predicated region
        $region45: #{tpu_custom_call.1} parent=39 // pred_check
          %p309 = pneg %p225
        $region46: #{tpu_custom_call.1} parent=39 // pred_check_branch
          %311 = sbr.rel (%p309) target = $region48
        $region47: #{tpu_custom_call.1} parent=39 // pred_region
          %v312 = vld [vmem:[#allocation6] sm:$0xff]
          %v313 = vld [vmem:[#allocation7] sm:$0xff]
          %v314 = vlog2.pop %v313
          %v315 = vmul.f32 %v314, 0.6931472
          %v316 = vadd.f32 %v312, %v315
          %v317 = vld [vmem:[#allocation5] sm:$0xff]
          %v318 = vsub.f32 %v316, %v317
          %319 = vst.msk [vmem:[%s185] sm:$0xff] %vm306, %v318
        $region48: #{tpu_custom_call.1} parent=39 // pred_fallthru
          _
      $region40: #{tpu_custom_call.1} parent=27 // pred_fallthru
        _
      %p320 = scmp.lt.s32.totalorder %s18, 0
      %s321 = scalar_select %p320, %s18, 0
      %s322 = smul.addr %s321, 8
      %s323 = scalar_lea.vmem %s2, %s322
      // Predicated region
      $region49: #{tpu_custom_call.1} parent=27 // pred_check
        %p324 = pneg %p104
      $region50: #{tpu_custom_call.1} parent=27 // pred_check_branch
        %326 = sbr.rel (%p324) target = $region52
      $region51: #{tpu_custom_call.1} parent=27 // pred_region
        _
      $region52: #{tpu_custom_call.1} parent=27 // pred_fallthru
        _
      // Predicated region
      $region53: #{tpu_custom_call.1} parent=27 // pred_check
        %p327 = pneg %p104
      $region54: #{tpu_custom_call.1} parent=27 // pred_check_branch
        %329 = sbr.rel (%p327) target = $region56
      $region55: #{tpu_custom_call.1} parent=27 // pred_region
        %p330 = scmp.lt.s32.totalorder %s18, 0
        %s331 = scalar_select %p330, %s18, 0
        %s332 = smul.addr %s331, 8
        %s333 = scalar_lea.vmem %s2, %s332
      $region56: #{tpu_custom_call.1} parent=27 // pred_fallthru
        _
    $region28: #{tpu_custom_call.1} parent=5 // pred_fallthru
      _
    %p334 = scmp.le.s32.totalorder 2, %s8
    // Predicated region
    $region57: #{tpu_custom_call.1} parent=5 // pred_check
      %p335 = pneg %p334
    $region58: #{tpu_custom_call.1} parent=5 // pred_check_branch
      %337 = sbr.rel (%p335) target = $region60
    $region59: #{tpu_custom_call.1} parent=5 // pred_region
      %s338 = ssub.s32 %s8, 2
    $region60: #{tpu_custom_call.1} parent=5 // pred_fallthru
      _
  $region6: #{tpu_custom_call.1} parent=0 // loop_footer
    %s12 = sadd.s32 1, %s8
  $region7: #{tpu_custom_call.1} parent=0 // loop_footer_branch
    %7 = sbr.rel target = $region3
  $region8: #{tpu_custom_call.1} parent=0 // loop_exit
    _

</llo_original>
